<compile_context>
chip_gen: v6e
topology: v6e:2x2x1
jax: 0.10.0
libtpu: 0.0.40
codegen_flags: <defaults>
</compile_context>

<pallas_src>
import functools

import jax
import jax.numpy as jnp
from jax.experimental import pallas as pl
from jax.experimental.pallas import tpu as pltpu


_LANE = 128
_MAX_TILE_N = 4096                 # lane-tile cap; amortizes per-step overhead
_SPLITS = 2                        # outer "parallel" grid axis (2nd TC on v7x)
_VMEM_BUDGET = 24 * 1024 * 1024    # headroom under the 32 MiB scoped VMEM limit


def _dice_partial_kernel(pred_ref, tgt_ref, pt_ref, pp_ref, tt_ref, *,
                         tiles_per_split, tile_n, n_valid, p_exp):
    """Accumulates per-class partial sums for one [C, TILE_N] tile.

    pred_ref: [C, TILE_N] logits (native dtype), class on sublanes, N on lanes.
    tgt_ref:  [1, TILE_N] int32 class ids (padded columns carry id == C).
    pt/pp/tt_ref: [C, TILE_N] f32 resident accumulators (one set per split).
    """
    split = pl.program_id(0)
    i = pl.program_id(1)

    @pl.when(i == 0)
    def _init():
        pt_ref[...] = jnp.zeros_like(pt_ref)
        pp_ref[...] = jnp.zeros_like(pp_ref)
        tt_ref[...] = jnp.zeros_like(tt_ref)

    logits = pred_ref[...].astype(jnp.float32)              # [C, T]
    num_classes = logits.shape[0]

    # Softmax over the class (sublane) axis.
    m = jnp.max(logits, axis=0, keepdims=True)              # [1, T] (XLU)
    e = jnp.exp(logits - m)                                 # [C, T] (EUP)
    denom = jnp.sum(e, axis=0, keepdims=True)               # [1, T] (XLU)
    # EUP approximate reciprocal + one Newton step (restores f32 accuracy) on
    # the thin [1, T] row; replaces a per-element divide over the full tile.
    r = pl.reciprocal(denom, approx=True)
    r = r * (2.0 - denom * r)
    probs = e * r                                           # [C, T]

    # Mask columns past the real N (tail-tile / split padding).
    tile_start = (split * tiles_per_split + i) * tile_n
    col = jax.lax.broadcasted_iota(jnp.int32, (1, tile_n), 1) + tile_start
    probs = probs * (col < n_valid).astype(jnp.float32)

    # One-hot target: class ids on the sublane axis; padded columns hold the
    # out-of-range id == num_classes, so they never match.
    cls = jax.lax.broadcasted_iota(jnp.int32, (num_classes, tile_n), 0)
    onehot = (cls == tgt_ref[...]).astype(jnp.float32)      # [C, T]

    pt_ref[...] += probs * onehot
    if p_exp == 2:
        pp_ref[...] += probs * probs
    else:
        pp_ref[...] += probs ** p_exp
    tt_ref[...] += onehot        # onehot**p == onehot for {0, 1} values


def dice_loss(predict, target, *, smooth=1.0, p_exp=2,
              max_tile_n=_MAX_TILE_N, splits=_SPLITS):
    """predict: [B, S, C] float logits; target: [B, S] int class indices."""
    B, S, C = predict.shape
    N = B * S

    # Layout plumbing: class axis -> sublanes, flattened (B*S) axis -> lanes.
    # Keep native dtype; upcast to f32 happens inside the kernel.
    pred_t = jnp.transpose(predict.reshape(N, C))            # [C, N]
    tgt_row = target.reshape(1, N).astype(jnp.int32)         # [1, N]

    # VMEM-aware tile size: double-buffered pred/tgt input blocks plus the
    # three resident f32 accumulators (counted double-buffered to be safe).
    in_bytes = jnp.dtype(predict.dtype).itemsize
    bytes_per_col = C * (2 * in_bytes + 6 * 4) + 2 * 4
    vmem_tile = max(_LANE, (_VMEM_BUDGET // bytes_per_col) // _LANE * _LANE)

    n_lanes = pl.cdiv(N, _LANE) * _LANE
    tile_n = min(max_tile_n, vmem_tile, max(_LANE, n_lanes))
    tiles_total = pl.cdiv(N, tile_n)
    splits = max(1, min(splits, tiles_total))   # no pure-padding splits
    tiles_per_split = pl.cdiv(tiles_total, splits)
    n_pad = splits * tiles_per_split * tile_n

    if n_pad != N:
        pred_t = jnp.pad(pred_t, ((0, 0), (0, n_pad - N)))
        # Pad target with the out-of-range class id C so padded columns never
        # one-hot into a real class.
        tgt_row = jnp.pad(tgt_row, ((0, 0), (0, n_pad - N)), constant_values=C)

    kernel = functools.partial(
        _dice_partial_kernel,
        tiles_per_split=tiles_per_split, tile_n=tile_n, n_valid=N, p_exp=p_exp)

    part = jax.ShapeDtypeStruct((splits, C, tile_n), jnp.float32)
    in_map = lambda c, i: (0, c * tiles_per_split + i)
    out_map = lambda c, i: (c, 0, 0)

    pt, pp, tt = pl.pallas_call(
        kernel,
        out_shape=(part, part, part),
        grid_spec=pltpu.PrefetchScalarGridSpec(
            num_scalar_prefetch=0,
            grid=(splits, tiles_per_split),
            in_specs=[
                pl.BlockSpec((C, tile_n), in_map),
                pl.BlockSpec((1, tile_n), in_map),
            ],
            out_specs=(
                pl.BlockSpec((None, C, tile_n), out_map),
                pl.BlockSpec((None, C, tile_n), out_map),
                pl.BlockSpec((None, C, tile_n), out_map),
            ),
        ),
        compiler_params=pltpu.CompilerParams(
            dimension_semantics=("parallel", "arbitrary"),
            vmem_limit_bytes=32 * 1024 * 1024),
    )(pred_t, tgt_row)

    # Tiny epilogue in plain JAX: one cross-lane reduce + the dice combine.
    sum_pt = jnp.sum(pt, axis=(0, 2))                        # [C]
    sum_pp = jnp.sum(pp, axis=(0, 2))
    sum_tt = jnp.sum(tt, axis=(0, 2))
    num = sum_pt * float(p_exp) + smooth                     # reference quirk:
    den = sum_pp + sum_tt + smooth                           # p doubles as the
    return jnp.sum(1.0 - num / den) / C                      # dice 2x factor


def dice_loss_ref(predict, target, *, smooth=1.0, p_exp=2):
    """Pure-JAX reference mirroring the PyTorch module (weight/ignore None)."""
    C = predict.shape[-1]
    probs = jax.nn.softmax(predict.astype(jnp.float32), axis=-1)
    onehot = jax.nn.one_hot(target, C, dtype=jnp.float32)
    sum_pt = jnp.sum(probs * onehot, axis=(0, 1))
    sum_pp = jnp.sum(probs ** p_exp, axis=(0, 1))
    sum_tt = jnp.sum(onehot ** p_exp, axis=(0, 1))
    num = sum_pt * p_exp + smooth
    den = sum_pp + sum_tt + smooth
    return jnp.sum(1.0 - num / den) / C


if __name__ == "__main__":
    key = jax.random.PRNGKey(0)
    k1, k2 = jax.random.split(key)

    B, S, C = 2, 8, 8
    predict = jax.random.normal(k1, (B, S, C), dtype=jnp.float32)
    target = jax.random.randint(k2, (B, S), 0, C, dtype=jnp.int32)

    loss = jax.block_until_ready(dice_loss(predict, target))
    ref = jax.block_until_ready(dice_loss_ref(predict, target))
    assert jnp.allclose(loss, ref, atol=1e-4, rtol=1e-4), (loss, ref)

    print("KERNEL_OK")
</pallas_src>

<mosaic_0001>
module attributes {stable_mosaic.version = 11 : i64} {
  func.func @_dice_partial_kernel(%arg0: i32, %arg1: i32, %arg2: memref<8x128xf32, #tpu.memory_space<vmem>>, %arg3: memref<1x128xi32, #tpu.memory_space<vmem>>, %arg4: memref<1x8x128xf32, #tpu.memory_space<vmem>>, %arg5: memref<1x8x128xf32, #tpu.memory_space<vmem>>, %arg6: memref<1x8x128xf32, #tpu.memory_space<vmem>>) attributes {dimension_semantics = [#tpu.dimension_semantics<parallel>, #tpu.dimension_semantics<arbitrary>], iteration_bounds = array<i64: 1, 1>, scalar_prefetch = 0 : i64, scratch_operands = 0 : i64, tpu.core_type = #tpu.core_type<tc>, window_params = [{transform_indices = @transform_0, window_bounds = array<i64: 8, 128>}, {transform_indices = @transform_1, window_bounds = array<i64: 1, 128>}, {transform_indices = @transform_2, window_bounds = array<i64: 1, 8, 128>}, {transform_indices = @transform_3, window_bounds = array<i64: 1, 8, 128>}, {transform_indices = @transform_4, window_bounds = array<i64: 1, 8, 128>}]} {
    %c0_i32 = arith.constant 0 : i32
    %0 = arith.cmpi eq, %arg1, %c0_i32 : i32
    %1 = arith.extui %0 : i1 to i32
    %c0_i32_0 = arith.constant 0 : i32
    %2 = arith.cmpi ne, %1, %c0_i32_0 : i32
    scf.if %2 {
      %cst_24 = arith.constant 0.000000e+00 : f32
      %56 = vector.broadcast %cst_24 : f32 to vector<8x128xf32>
      %c0_25 = arith.constant 0 : index
      %c0_26 = arith.constant 0 : index
      %c0_27 = arith.constant 0 : index
      %57 = vector.load %arg4[%c0_25, %c0_26, %c0_27] : memref<1x8x128xf32, #tpu.memory_space<vmem>>, vector<1x8x128xf32>
      %58 = vector.shape_cast %57 : vector<1x8x128xf32> to vector<8x128xf32>
      %59 = vector.shape_cast %56 : vector<8x128xf32> to vector<1x8x128xf32>
      tpu.vector_store %arg4[%c0_25, %c0_26, %c0_27], %59 {strides = array<i32>} : memref<1x8x128xf32, #tpu.memory_space<vmem>>, vector<1x8x128xf32>,
      %cst_28 = arith.constant 0.000000e+00 : f32
      %60 = vector.broadcast %cst_28 : f32 to vector<8x128xf32>
      %c0_29 = arith.constant 0 : index
      %c0_30 = arith.constant 0 : index
      %c0_31 = arith.constant 0 : index
      %61 = vector.load %arg5[%c0_29, %c0_30, %c0_31] : memref<1x8x128xf32, #tpu.memory_space<vmem>>, vector<1x8x128xf32>
      %62 = vector.shape_cast %61 : vector<1x8x128xf32> to vector<8x128xf32>
      %63 = vector.shape_cast %60 : vector<8x128xf32> to vector<1x8x128xf32>
      tpu.vector_store %arg5[%c0_29, %c0_30, %c0_31], %63 {strides = array<i32>} : memref<1x8x128xf32, #tpu.memory_space<vmem>>, vector<1x8x128xf32>,
      %cst_32 = arith.constant 0.000000e+00 : f32
      %64 = vector.broadcast %cst_32 : f32 to vector<8x128xf32>
      %c0_33 = arith.constant 0 : index
      %c0_34 = arith.constant 0 : index
      %c0_35 = arith.constant 0 : index
      %65 = vector.load %arg6[%c0_33, %c0_34, %c0_35] : memref<1x8x128xf32, #tpu.memory_space<vmem>>, vector<1x8x128xf32>
      %66 = vector.shape_cast %65 : vector<1x8x128xf32> to vector<8x128xf32>
      %67 = vector.shape_cast %64 : vector<8x128xf32> to vector<1x8x128xf32>
      tpu.vector_store %arg6[%c0_33, %c0_34, %c0_35], %67 {strides = array<i32>} : memref<1x8x128xf32, #tpu.memory_space<vmem>>, vector<1x8x128xf32>,
    } else {
    }
    %c0 = arith.constant 0 : index
    %c0_1 = arith.constant 0 : index
    %3 = vector.load %arg2[%c0, %c0_1] : memref<8x128xf32, #tpu.memory_space<vmem>>, vector<8x128xf32>
    %cst = arith.constant dense<0xFF800000> : vector<128xf32>
    %4 = vector.multi_reduction <maximumf>, %3, %cst [0] : vector<8x128xf32> to vector<128xf32>
    %5 = vector.shape_cast %4 : vector<128xf32> to vector<1x128xf32>
    %6 = vector.broadcast %5 : vector<1x128xf32> to vector<8x128xf32>
    %7 = arith.subf %3, %6 : vector<8x128xf32>
    %8 = math.exp %7 : vector<8x128xf32>
    %cst_2 = arith.constant dense<0.000000e+00> : vector<128xf32>
    %9 = vector.multi_reduction <add>, %8, %cst_2 [0] : vector<8x128xf32> to vector<128xf32>
    %10 = vector.shape_cast %9 : vector<128xf32> to vector<1x128xf32>
    %11 = tpu.reciprocal %10 {approx = true} : vector<1x128xf32> -> vector<1x128xf32>
    %12 = arith.mulf %10, %11 : vector<1x128xf32>
    %cst_3 = arith.constant 2.000000e+00 : f32
    %13 = vector.broadcast %cst_3 : f32 to vector<1x128xf32>
    %14 = arith.subf %13, %12 : vector<1x128xf32>
    %15 = arith.mulf %11, %14 : vector<1x128xf32>
    %16 = vector.broadcast %15 : vector<1x128xf32> to vector<8x128xf32>
    %17 = arith.mulf %8, %16 : vector<8x128xf32>
    %c1_i32 = arith.constant 1 : i32
    %18 = arith.muli %arg0, %c1_i32 : i32
    %19 = arith.addi %18, %arg1 : i32
    %c128_i32 = arith.constant 128 : i32
    %20 = arith.muli %19, %c128_i32 : i32
    %21 = tpu.iota {dimensions = array<i32: 1>} : vector<1x128xi32>
    %22 = vector.broadcast %20 : i32 to vector<1x128xi32>
    %23 = arith.addi %21, %22 : vector<1x128xi32>
    %c16_i32 = arith.constant 16 : i32
    %24 = vector.broadcast %c16_i32 : i32 to vector<1x128xi32>
    %25 = arith.cmpi slt, %23, %24 : vector<1x128xi32>
    %26 = arith.extui %25 : vector<1x128xi1> to vector<1x128xi32>
    %27 = arith.sitofp %26 : vector<1x128xi32> to vector<1x128xf32>
    %28 = vector.broadcast %27 : vector<1x128xf32> to vector<8x128xf32>
    %29 = arith.mulf %17, %28 : vector<8x128xf32>
    %30 = tpu.iota {dimensions = array<i32: 0>} : vector<8x128xi32>
    %c0_4 = arith.constant 0 : index
    %c0_5 = arith.constant 0 : index
    %31 = vector.load %arg3[%c0_4, %c0_5] : memref<1x128xi32, #tpu.memory_space<vmem>>, vector<1x128xi32>
    %32 = vector.broadcast %31 : vector<1x128xi32> to vector<8x128xi32>
    %33 = arith.cmpi eq, %30, %32 : vector<8x128xi32>
    %34 = arith.extui %33 : vector<8x128xi1> to vector<8x128xi32>
    %35 = arith.sitofp %34 : vector<8x128xi32> to vector<8x128xf32>
    %c0_6 = arith.constant 0 : index
    %c0_7 = arith.constant 0 : index
    %c0_8 = arith.constant 0 : index
    %36 = vector.load %arg4[%c0_6, %c0_7, %c0_8] : memref<1x8x128xf32, #tpu.memory_space<vmem>>, vector<1x8x128xf32>
    %37 = vector.shape_cast %36 : vector<1x8x128xf32> to vector<8x128xf32>
    %38 = arith.mulf %29, %35 : vector<8x128xf32>
    %39 = arith.addf %37, %38 : vector<8x128xf32>
    %c0_9 = arith.constant 0 : index
    %c0_10 = arith.constant 0 : index
    %c0_11 = arith.constant 0 : index
    %40 = vector.load %arg4[%c0_9, %c0_10, %c0_11] : memref<1x8x128xf32, #tpu.memory_space<vmem>>, vector<1x8x128xf32>
    %41 = vector.shape_cast %40 : vector<1x8x128xf32> to vector<8x128xf32>
    %42 = vector.shape_cast %39 : vector<8x128xf32> to vector<1x8x128xf32>
    tpu.vector_store %arg4[%c0_9, %c0_10, %c0_11], %42 {strides = array<i32>} : memref<1x8x128xf32, #tpu.memory_space<vmem>>, vector<1x8x128xf32>,
    %c0_12 = arith.constant 0 : index
    %c0_13 = arith.constant 0 : index
    %c0_14 = arith.constant 0 : index
    %43 = vector.load %arg5[%c0_12, %c0_13, %c0_14] : memref<1x8x128xf32, #tpu.memory_space<vmem>>, vector<1x8x128xf32>
    %44 = vector.shape_cast %43 : vector<1x8x128xf32> to vector<8x128xf32>
    %45 = arith.mulf %29, %29 : vector<8x128xf32>
    %46 = arith.addf %44, %45 : vector<8x128xf32>
    %c0_15 = arith.constant 0 : index
    %c0_16 = arith.constant 0 : index
    %c0_17 = arith.constant 0 : index
    %47 = vector.load %arg5[%c0_15, %c0_16, %c0_17] : memref<1x8x128xf32, #tpu.memory_space<vmem>>, vector<1x8x128xf32>
    %48 = vector.shape_cast %47 : vector<1x8x128xf32> to vector<8x128xf32>
    %49 = vector.shape_cast %46 : vector<8x128xf32> to vector<1x8x128xf32>
    tpu.vector_store %arg5[%c0_15, %c0_16, %c0_17], %49 {strides = array<i32>} : memref<1x8x128xf32, #tpu.memory_space<vmem>>, vector<1x8x128xf32>,
    %c0_18 = arith.constant 0 : index
    %c0_19 = arith.constant 0 : index
    %c0_20 = arith.constant 0 : index
    %50 = vector.load %arg6[%c0_18, %c0_19, %c0_20] : memref<1x8x128xf32, #tpu.memory_space<vmem>>, vector<1x8x128xf32>
    %51 = vector.shape_cast %50 : vector<1x8x128xf32> to vector<8x128xf32>
    %52 = arith.addf %51, %35 : vector<8x128xf32>
    %c0_21 = arith.constant 0 : index
    %c0_22 = arith.constant 0 : index
    %c0_23 = arith.constant 0 : index
    %53 = vector.load %arg6[%c0_21, %c0_22, %c0_23] : memref<1x8x128xf32, #tpu.memory_space<vmem>>, vector<1x8x128xf32>
    %54 = vector.shape_cast %53 : vector<1x8x128xf32> to vector<8x128xf32>
    %55 = vector.shape_cast %52 : vector<8x128xf32> to vector<1x8x128xf32>
    tpu.vector_store %arg6[%c0_21, %c0_22, %c0_23], %55 {strides = array<i32>} : memref<1x8x128xf32, #tpu.memory_space<vmem>>, vector<1x8x128xf32>,
    return
  }
  func.func @transform_0(%arg0: i32, %arg1: i32) -> (i32, i32) {
    %c1_i32 = arith.constant 1 : i32
    %0 = arith.muli %arg0, %c1_i32 : i32
    %1 = arith.addi %0, %arg1 : i32
    %c0_i32 = arith.constant 0 : i32
    %c0_i32_0 = arith.constant 0 : i32
    return %c0_i32, %1 : i32, i32
  }
  func.func @transform_1(%arg0: i32, %arg1: i32) -> (i32, i32) {
    %c1_i32 = arith.constant 1 : i32
    %0 = arith.muli %arg0, %c1_i32 : i32
    %1 = arith.addi %0, %arg1 : i32
    %c0_i32 = arith.constant 0 : i32
    %c0_i32_0 = arith.constant 0 : i32
    return %c0_i32, %1 : i32, i32
  }
  func.func @transform_2(%arg0: i32, %arg1: i32) -> (i32, i32, i32) {
    %c0_i32 = arith.constant 0 : i32
    %c0_i32_0 = arith.constant 0 : i32
    %c0_i32_1 = arith.constant 0 : i32
    return %arg0, %c0_i32, %c0_i32_0 : i32, i32, i32
  }
  func.func @transform_3(%arg0: i32, %arg1: i32) -> (i32, i32, i32) {
    %c0_i32 = arith.constant 0 : i32
    %c0_i32_0 = arith.constant 0 : i32
    %c0_i32_1 = arith.constant 0 : i32
    return %arg0, %c0_i32, %c0_i32_0 : i32, i32, i32
  }
  func.func @transform_4(%arg0: i32, %arg1: i32) -> (i32, i32, i32) {
    %c0_i32 = arith.constant 0 : i32
    %c0_i32_0 = arith.constant 0 : i32
    %c0_i32_1 = arith.constant 0 : i32
    return %arg0, %c0_i32, %c0_i32_0 : i32, i32, i32
  }
}

</mosaic_0001>

<llo_original>
// kernel: tpu_custom_call.1
$region0: #{tpu_custom_call.1}
  #allocation0 [shape = 'u32[]', space=smem, size = 0x4, offset = 0x4, fixed_abs, tag = 'smem constant byte address 0x4 - core index']
  #allocation1 [shape = 'u32[144,128]{1,0:T(1,128)}', space=vmem, size = 0x12000, scoped, tag = 'internal scratch']
  %s0 = inlined_call_operand.hbm [shape: f32[8,128], index: 0, kind: input, shape index: {}]
  %s1 = inlined_call_operand.vmem [shape: s32[1,128], index: 1, kind: input, shape index: {}]
  %s2 = inlined_call_operand.hbm [shape: f32[1,8,128], index: 2, kind: output, shape index: {0}]
  %s3 = inlined_call_operand.hbm [shape: f32[1,8,128], index: 3, kind: output, shape index: {1}]
  %s4 = inlined_call_operand.hbm [shape: f32[1,8,128], index: 4, kind: output, shape index: {2}]
  %5 = xla_tuple %s2, %s3, %s4
  %s6 = sld [smem:[#allocation0]]
  $region42: #{tpu_custom_call.1} parent=0
    _
  %s8 = ssub.s32 1, %s6
  %s9 = scalar_select 0, %s8, %s6
  $region1: #{tpu_custom_call.1} parent=0
    #allocation2 [shape = 'u8[4096]{0}', space=vmem, size = 0x1000, scoped, tag = 'input window, operand 0, single buffered']
    #allocation3 [shape = 's32[1]{0}', space=sflag, size = 0x4, scoped, tag = 'scoped memory for tpu_custom_call.1']
    #allocation4 [shape = 's32[1]{0}', space=sflag, size = 0x4, scoped, tag = 'scoped memory for tpu_custom_call.1']
    #allocation5 [shape = 'u8[4096]{0}', space=vmem, size = 0x1000, scoped, tag = 'output window, operand 0, single buffered']
    #allocation6 [shape = 'u8[4096]{0}', space=vmem, size = 0x1000, scoped, tag = 'output window, operand 1, single buffered']
    #allocation7 [shape = 's32[1]{0}', space=sflag, size = 0x4, scoped, tag = 'scoped memory for tpu_custom_call.1']
    #allocation8 [shape = 'u8[4096]{0}', space=vmem, size = 0x1000, scoped, tag = 'output window, operand 2, single buffered']
    %10 = vsyncpa [#allocation3], 0
    %11 = vsyncpa [#allocation4], 0
    %12 = vsyncpa [#allocation7], 0
    // Predicated region
    $region2: #{tpu_custom_call.1} parent=1 // pred_check
      _
    $region3: #{tpu_custom_call.1} parent=1 // pred_check_branch
      %14 = sbr.rel (0) target = $region5
    $region4: #{tpu_custom_call.1} parent=1 // pred_region
      %s15 = sadd.s32 0, 0
      %s17 = ssub.s32 128, 128
      %18 = vsyncadd [#allocation3], %s17
      %s19 = smul.addr %s15, 128
      %s20 = scalar_lea.hbm %s0, %s19
      %s22 = sshll.u32 [#allocation2], 4
      %s23 = int_to_ptr.vmem [resolvable:$true] %s22
      %25 = dma.hbm_to_vmem [thread:$0]  %s20, 128, %s23, [#allocation3]
    $region5: #{tpu_custom_call.1} parent=1 // pred_fallthru
      _
    // Predicated region
    $region6: #{tpu_custom_call.1} parent=1 // pred_check
      _
    $region7: #{tpu_custom_call.1} parent=1 // pred_check_branch
      %27 = sbr.rel (0) target = $region9
    $region8: #{tpu_custom_call.1} parent=1 // pred_region
      %s28 = sadd.s32 0, 0
      %p29 = scmp.lt.s32.totalorder %s28, 0
      %s30 = scalar_select %p29, %s28, 0
      %s31 = scalar_lea.vmem %s1, %s30
      %s32 = sadd.s32 0, 0
    $region9: #{tpu_custom_call.1} parent=1 // pred_fallthru
      _
    // Predicated region
    $region10: #{tpu_custom_call.1} parent=1 // pred_check
      _
    $region11: #{tpu_custom_call.1} parent=1 // pred_check_branch
      %34 = sbr.rel (0) target = $region13
    $region12: #{tpu_custom_call.1} parent=1 // pred_region
      %35 = dma.done [#allocation3], 128
    $region13: #{tpu_custom_call.1} parent=1 // pred_fallthru
      _
    %s36 = sadd.s32 0, 0
    %p37 = scmp.lt.s32.totalorder %s36, 0
    %s38 = scalar_select %p37, %s36, 0
    %s39 = scalar_lea.vmem %s1, %s38
    %s40 = sadd.s32 0, 0
    %s41 = sadd.s32 0, 0
    %p42 = scmp.lt.s32.totalorder %s41, 0
    %s43 = scalar_select %p42, %s41, 0
    %s44 = scalar_lea.vmem %s1, %s43
    %s45 = sadd.s32 0, 0
    %p46 = scmp.eq.s32.totalorder 0, 0
    // Predicated region
    $region14: #{tpu_custom_call.1} parent=1 // pred_check
      %p47 = pneg %p46
    $region15: #{tpu_custom_call.1} parent=1 // pred_check_branch
      %49 = sbr.rel (%p47) target = $region17
    $region16: #{tpu_custom_call.1} parent=1 // pred_region
      %50 = vst [vmem:[#allocation5] sm:$0xff] 0.0
      %51 = vst [vmem:[#allocation6] sm:$0xff] 0.0
      %52 = vst [vmem:[#allocation8] sm:$0xff] 0.0
    $region17: #{tpu_custom_call.1} parent=1 // pred_fallthru
      _
    %v53 = vld [vmem:[#allocation2] sm:$0xff]
    %v54 = vrot.slane %v53, 4
    %v55 = vmax.f32 %v53, %v54
    %v56 = vrot.slane %v55, 2
    %v57 = vmax.f32 %v55, %v56
    %v58 = vrot.slane %v57, 1
    %v59 = vmax.f32 %v57, %v58
    %v60 = vsub.f32 %v53, %v59
    %v61 = vmul.f32 %v60, 1.442695
    %v62 = vpow.pop %v61
    %v63 = vrot.slane %v62, 4
    %v64 = vadd.f32 %v62, %v63
    %v65 = vrot.slane %v64, 2
    %v66 = vadd.f32 %v64, %v65
    %v67 = vrot.slane %v66, 1
    %v68 = vadd.f32 %v66, %v67
    %v69 = vrcp.pop %v68
    %v70 = vmul.f32 %v68, %v69
    %v71 = vsub.f32 2.0, %v70
    %v72 = vmul.f32 %v69, %v71
    %v73 = vmul.f32 %v62, %v72
    %s74 = sadd.s32 0, 0
    %s75 = smul.u32 %s74, 128
    %v76 = vlaneseq
    %v77 = vand.u32 %v76, 127
    %v78 = vstv %s75
    %v79 = vadd.s32 %v77, %v78
    %vm80 = vcmp.lt.s32.totalorder %v79, 16
    %v81 = vsel %vm80, 1, 0
    %v82 = vcvt.s32.f32 %v81
    %v83 = vmul.f32 %v73, %v82
    %v84 = vlaneseq
    %v85 = vshrl.u32 %v84, 7
    %v86 = vld [vmem:[%s44] sm:$0x1]
    %v87 = vlaneseq
    %v88 = vshrl.u32 %v87, 7
    %v89 = vsub.s32 0, %v88
    %v90 = vrot.slane %v86, %v89
    %vm91 = vcmp.eq.s32.totalorder %v85, %v90
    %v92 = vsel %vm91, 1, 0
    %v93 = vcvt.s32.f32 %v92
    %v94 = vld [vmem:[#allocation5] sm:$0xff]
    %v95 = vmul.f32 %v83, %v93
    %v96 = vadd.f32 %v94, %v95
    %97 = vst [vmem:[#allocation5] sm:$0xff] %v96
    %v98 = vld [vmem:[#allocation6] sm:$0xff]
    %v99 = vmul.f32 %v83, %v83
    %v100 = vadd.f32 %v98, %v99
    %101 = vst [vmem:[#allocation6] sm:$0xff] %v100
    %v102 = vld [vmem:[#allocation8] sm:$0xff]
    %v103 = vadd.f32 %v102, %v93
    %104 = vst [vmem:[#allocation8] sm:$0xff] %v103
    // Predicated region
    $region18: #{tpu_custom_call.1} parent=1 // pred_check
      _
    $region19: #{tpu_custom_call.1} parent=1 // pred_check_branch
      %106 = sbr.rel (0) target = $region21
    $region20: #{tpu_custom_call.1} parent=1 // pred_region
      %s108 = ssub.s32 128, 128
      %109 = vsyncadd [#allocation4], %s108
      %s111 = sshll.u32 [#allocation5], 4
      %s112 = int_to_ptr.vmem [resolvable:$true] %s111
      %114 = dma.vmem_to_hbm [thread:$0]  %s112, 128, %s2, [#allocation4]
    $region21: #{tpu_custom_call.1} parent=1 // pred_fallthru
      _
    // Predicated region
    $region22: #{tpu_custom_call.1} parent=1 // pred_check
      _
    $region23: #{tpu_custom_call.1} parent=1 // pred_check_branch
      %116 = sbr.rel (0) target = $region25
    $region24: #{tpu_custom_call.1} parent=1 // pred_region
      %s118 = ssub.s32 128, 128
      %119 = vsyncadd [#allocation7], %s118
      %s121 = sshll.u32 [#allocation6], 4
      %s122 = int_to_ptr.vmem [resolvable:$true] %s121
      %124 = dma.vmem_to_hbm [thread:$0]  %s122, 128, %s3, [#allocation7]
    $region25: #{tpu_custom_call.1} parent=1 // pred_fallthru
      _
    // Predicated region
    $region26: #{tpu_custom_call.1} parent=1 // pred_check
      _
    $region27: #{tpu_custom_call.1} parent=1 // pred_check_branch
      %126 = sbr.rel (0) target = $region29
    $region28: #{tpu_custom_call.1} parent=1 // pred_region
      %s128 = ssub.s32 128, 128
      %129 = vsyncadd [#allocation7], %s128
      %s131 = sshll.u32 [#allocation8], 4
      %s132 = int_to_ptr.vmem [resolvable:$true] %s131
      %134 = dma.vmem_to_hbm [thread:$0]  %s132, 128, %s4, [#allocation7]
    $region29: #{tpu_custom_call.1} parent=1 // pred_fallthru
      _
    // Predicated region
    $region30: #{tpu_custom_call.1} parent=1 // pred_check
      _
    $region31: #{tpu_custom_call.1} parent=1 // pred_check_branch
      %136 = sbr.rel (0) target = $region33
    $region32: #{tpu_custom_call.1} parent=1 // pred_region
      %137 = dma.done [#allocation4], 128
    $region33: #{tpu_custom_call.1} parent=1 // pred_fallthru
      _
    // Predicated region
    $region34: #{tpu_custom_call.1} parent=1 // pred_check
      _
    $region35: #{tpu_custom_call.1} parent=1 // pred_check_branch
      %139 = sbr.rel (0) target = $region37
    $region36: #{tpu_custom_call.1} parent=1 // pred_region
      %140 = dma.done [#allocation7], 128
    $region37: #{tpu_custom_call.1} parent=1 // pred_fallthru
      _
    // Predicated region
    $region38: #{tpu_custom_call.1} parent=1 // pred_check
      _
    $region39: #{tpu_custom_call.1} parent=1 // pred_check_branch
      %142 = sbr.rel (0) target = $region41
    $region40: #{tpu_custom_call.1} parent=1 // pred_region
      %143 = dma.done [#allocation7], 128
    $region41: #{tpu_custom_call.1} parent=1 // pred_fallthru
      _
    %144 = vsyncpa [#allocation3], 1
    %145 = vsyncpa [#allocation4], 1
    %146 = vsyncpa [#allocation7], 1

</llo_original>
